<compile_context>
chip_gen: v5e
topology: v5e:2x2
jax: 0.10.0
libtpu: 0.0.40
codegen_flags: <defaults>
</compile_context>

<pallas_src>
import jax
import jax.numpy as jnp
from jax.experimental import pallas as pl
from jax.experimental.pallas import tpu as pltpu


def _rows_kernel(x_ref, w_ref, b_ref, o_ref):
    # x_ref: (TM, C_in) f32   w_ref: (C_in, C_out) bf16 (resident)
    # b_ref: (1, C_out) f32 (resident)   o_ref: (TM, C_out) f32
    x = x_ref[...].astype(jnp.bfloat16)  # in-kernel VPU cast (hidden under DMA/MXU)
    acc = jnp.dot(x, w_ref[...], preferred_element_type=jnp.float32)
    o_ref[...] = acc + b_ref[...]


def _spatial_kernel(x_ref, w_ref, b_ref, o_ref):
    # x_ref: (1, C_in, THW) f32   w_ref: (C_out, C_in) bf16 (resident)
    # b_ref: (C_out, 1) f32 (resident)   o_ref: (1, C_out, THW) f32
    x = x_ref[0].astype(jnp.bfloat16)                                   # (C_in, THW)
    acc = jnp.dot(w_ref[...], x, preferred_element_type=jnp.float32)    # (C_out, THW)
    o_ref[0] = acc + b_ref[...]


def conv2d_1x1(x_nchw, weight, bias, *, tile_rows=512, tile_hw=512):
    """1x1 conv, stride 1, with bias.

    x_nchw: (N, C_in, H, W)  float32
    weight: (C_out, C_in, 1, 1) float32
    bias:   (C_out,) float32
    returns (N, C_out, H, W) float32
    """
    N, C_in, H, W = x_nchw.shape
    C_out = weight.shape[0]
    HW = H * W

    if HW == 1:
        # --- Row path: (M, C_in) @ (C_in, C_out), M = N ------------------------
        M = N
        x_rows = x_nchw.reshape(M, C_in)                       # pure reshape (HW == 1)
        w_mat = weight.reshape(C_out, C_in).T.astype(jnp.bfloat16)   # (C_in, C_out), static
        b_row = bias.reshape(1, C_out)                         # f32, added post-accum

        # Full block for small M (block == array dim, always legal); otherwise a
        # 512-row tile (divisible by 8); ragged last tile masked by Pallas.
        tm = M if M <= tile_rows else tile_rows
        grid = (pl.cdiv(M, tm),)

        out_rows = pl.pallas_call(
            _rows_kernel,
            out_shape=jax.ShapeDtypeStruct((M, C_out), jnp.float32),
            grid=grid,
            in_specs=[
                pl.BlockSpec((tm, C_in), lambda i: (i, 0)),
                pl.BlockSpec((C_in, C_out), lambda i: (0, 0)),   # resident weight
                pl.BlockSpec((1, C_out), lambda i: (0, 0)),      # resident bias
            ],
            out_specs=pl.BlockSpec((tm, C_out), lambda i: (i, 0)),
            compiler_params=pltpu.CompilerParams(
                dimension_semantics=("parallel",)),
        )(x_rows, w_mat, b_row)

        return out_rows.reshape(N, C_out, H, W)

    # --- Spatial path: out[n] = W @ x[n] (C_in contracted), no transposes ------
    x_sp = x_nchw.reshape(N, C_in, HW)                          # pure reshape (NCHW)
    w_mat = weight.reshape(C_out, C_in).astype(jnp.bfloat16)    # (C_out, C_in), static
    b_col = bias.reshape(C_out, 1)                              # f32 column

    thw = HW if HW <= tile_hw else tile_hw                      # 512 is 128-divisible
    grid = (N, pl.cdiv(HW, thw))

    out = pl.pallas_call(
        _spatial_kernel,
        out_shape=jax.ShapeDtypeStruct((N, C_out, HW), jnp.float32),
        grid=grid,
        in_specs=[
            pl.BlockSpec((1, C_in, thw), lambda n, j: (n, 0, j)),
            pl.BlockSpec((C_out, C_in), lambda n, j: (0, 0)),    # resident weight
            pl.BlockSpec((C_out, 1), lambda n, j: (0, 0)),       # resident bias
        ],
        out_specs=pl.BlockSpec((1, C_out, thw), lambda n, j: (n, 0, j)),
        compiler_params=pltpu.CompilerParams(
            dimension_semantics=("parallel", "parallel")),
    )(x_sp, w_mat, b_col)

    return out.reshape(N, C_out, H, W)


if __name__ == "__main__":
    key = jax.random.PRNGKey(0)
    k_x, k_w, k_b, k_x2 = jax.random.split(key, 4)

    N, C_in, H, W = 1, 64, 1, 1
    C_out = 1536

    # Deterministic parameter init (synthetic; mirrors PyTorch's fan_in-scaled uniform).
    bound = 1.0 / (C_in ** 0.5)
    weight = jax.random.uniform(k_w, (C_out, C_in, 1, 1), jnp.float32, -bound, bound)
    bias = jax.random.uniform(k_b, (C_out,), jnp.float32, -bound, bound)

    # Shipped module shape: (1, 64, 1, 1).
    x = jax.random.normal(k_x, (N, C_in, H, W), jnp.float32)
    out = jax.block_until_ready(conv2d_1x1(x, weight, bias))

    ref = (x.reshape(N, C_in) @ weight.reshape(C_out, C_in).T + bias).reshape(
        N, C_out, H, W
    )
    assert out.shape == (N, C_out, H, W)
    assert jnp.allclose(out, ref, atol=2e-2, rtol=2e-2)

    # Secondary sanity check for the spatial (HW > 1) path at a small shape.
    N2, H2, W2 = 2, 16, 16
    x2 = jax.random.normal(k_x2, (N2, C_in, H2, W2), jnp.float32)
    out2 = jax.block_until_ready(conv2d_1x1(x2, weight, bias))
    ref2 = jnp.einsum(
        "oc,nchw->nohw", weight.reshape(C_out, C_in), x2
    ) + bias.reshape(1, C_out, 1, 1)
    assert out2.shape == (N2, C_out, H2, W2)
    assert jnp.allclose(out2, ref2, atol=2e-2, rtol=2e-2)

    print("KERNEL_OK")
</pallas_src>

<mosaic_0001>
module attributes {stable_mosaic.version = 11 : i64} {
  func.func @_rows_kernel(%arg0: i32, %arg1: memref<1x64xf32, #tpu.memory_space<vmem>>, %arg2: memref<64x1536xbf16, #tpu.memory_space<vmem>>, %arg3: memref<1x1536xf32, #tpu.memory_space<vmem>>, %arg4: memref<1x1536xf32, #tpu.memory_space<vmem>>) attributes {dimension_semantics = [#tpu.dimension_semantics<parallel>], iteration_bounds = array<i64: 1>, scalar_prefetch = 0 : i64, scratch_operands = 0 : i64, tpu.core_type = #tpu.core_type<tc>, window_params = [{transform_indices = @transform_0, window_bounds = array<i64: 1, 64>}, {pipeline_mode = #tpu.pipeline_mode<synchronous>, transform_indices = @transform_1, window_bounds = array<i64: 64, 1536>}, {pipeline_mode = #tpu.pipeline_mode<synchronous>, transform_indices = @transform_2, window_bounds = array<i64: 1, 1536>}, {transform_indices = @transform_3, window_bounds = array<i64: 1, 1536>}]} {
    %c0 = arith.constant 0 : index
    %c0_0 = arith.constant 0 : index
    %0 = vector.load %arg1[%c0, %c0_0] : memref<1x64xf32, #tpu.memory_space<vmem>>, vector<1x64xf32>
    %1 = arith.truncf %0 : vector<1x64xf32> to vector<1x64xbf16>
    %c0_1 = arith.constant 0 : index
    %c0_2 = arith.constant 0 : index
    %2 = vector.load %arg2[%c0_1, %c0_2] : memref<64x1536xbf16, #tpu.memory_space<vmem>>, vector<64x1536xbf16>
    %cst = arith.constant dense<0.000000e+00> : vector<1x1536xf32>
    %3 = tpu.matmul %1, %2, %cst {dimension_numbers = #tpu.dot_dimension_numbers<[1], [0], [0], [1], [0, 0, 1, 1], [], []>} : vector<1x64xbf16>, vector<64x1536xbf16>, vector<1x1536xf32> -> vector<1x1536xf32>
    %c0_3 = arith.constant 0 : index
    %c0_4 = arith.constant 0 : index
    %4 = vector.load %arg3[%c0_3, %c0_4] : memref<1x1536xf32, #tpu.memory_space<vmem>>, vector<1x1536xf32>
    %5 = arith.addf %3, %4 : vector<1x1536xf32>
    %c0_5 = arith.constant 0 : index
    %c0_6 = arith.constant 0 : index
    %6 = vector.load %arg4[%c0_5, %c0_6] : memref<1x1536xf32, #tpu.memory_space<vmem>>, vector<1x1536xf32>
    tpu.vector_store %arg4[%c0_5, %c0_6], %5 {strides = array<i32>} : memref<1x1536xf32, #tpu.memory_space<vmem>>, vector<1x1536xf32>,
    return
  }
  func.func @transform_0(%arg0: i32) -> (i32, i32) {
    %c0_i32 = arith.constant 0 : i32
    %c0_i32_0 = arith.constant 0 : i32
    return %arg0, %c0_i32 : i32, i32
  }
  func.func @transform_1(%arg0: i32) -> (i32, i32) {
    %c0_i32 = arith.constant 0 : i32
    %c0_i32_0 = arith.constant 0 : i32
    %c0_i32_1 = arith.constant 0 : i32
    return %c0_i32, %c0_i32_0 : i32, i32
  }
  func.func @transform_2(%arg0: i32) -> (i32, i32) {
    %c0_i32 = arith.constant 0 : i32
    %c0_i32_0 = arith.constant 0 : i32
    %c0_i32_1 = arith.constant 0 : i32
    return %c0_i32, %c0_i32_0 : i32, i32
  }
  func.func @transform_3(%arg0: i32) -> (i32, i32) {
    %c0_i32 = arith.constant 0 : i32
    %c0_i32_0 = arith.constant 0 : i32
    return %arg0, %c0_i32 : i32, i32
  }
}

</mosaic_0001>

<llo_original>
// kernel: tpu_custom_call.1
$region0: #{tpu_custom_call.1}
  #allocation0 [shape = 'u32[]', space=smem, size = 0x4, offset = 0x4, fixed_abs, tag = 'smem constant byte address 0x4 - core index']
  #allocation1 [shape = 'u32[72,128]{1,0:T(1,128)}', space=vmem, size = 0x9000, scoped, tag = 'internal scratch']
  %s0 = inlined_call_operand.hbm [shape: f32[1,64], index: 0, kind: input, shape index: {}]
  %s1 = inlined_call_operand.hbm [shape: bf16[64,1536], index: 1, kind: input, shape index: {}]
  %s2 = inlined_call_operand.hbm [shape: f32[1,1536], index: 2, kind: input, shape index: {}]
  %s3 = inlined_call_operand.hbm [shape: f32[1,1536], index: 3, kind: output, shape index: {}]
  %s4 = sld [smem:[#allocation0]]
  $region34: #{tpu_custom_call.1} parent=0
    _
  %s6 = ssub.s32 1, %s4
  %s7 = scalar_select 0, %s6, %s4
  $region1: #{tpu_custom_call.1} parent=0
    #allocation2 [shape = 'u8[512]{0}', space=vmem, size = 0x400, scoped, tag = 'input window, operand 0, single buffered']
    #allocation3 [shape = 's32[1]{0}', space=sflag, size = 0x4, scoped, tag = 'scoped memory for tpu_custom_call.1']
    #allocation4 [shape = 's32[1]{0}', space=sflag, size = 0x4, scoped, tag = 'scoped memory for tpu_custom_call.1']
    #allocation5 [shape = 'u8[196608]{0}', space=vmem, size = 0x30000, scoped, tag = 'input window, operand 1, single buffered']
    #allocation6 [shape = 's32[1]{0}', space=sflag, size = 0x4, scoped, tag = 'scoped memory for tpu_custom_call.1']
    #allocation7 [shape = 'u8[6144]{0}', space=vmem, size = 0x1800, scoped, tag = 'input window, operand 2, single buffered']
    #allocation8 [shape = 'u8[6144]{0}', space=vmem, size = 0x1800, scoped, tag = 'output window, operand 0, single buffered']
    %8 = vsyncpa [#allocation3], 0
    %9 = vsyncpa [#allocation6], 0
    %10 = vsyncpa [#allocation4], 0
    // Predicated region
    $region2: #{tpu_custom_call.1} parent=1 // pred_check
      _
    $region3: #{tpu_custom_call.1} parent=1 // pred_check_branch
      %12 = sbr.rel (0) target = $region5
    $region4: #{tpu_custom_call.1} parent=1 // pred_region
      %14 = vsyncadd [#allocation3], 0
      %s16 = sshll.u32 %s0, 4
      %s17 = int_to_ptr.hbm [resolvable:$true] %s16
      %s18 = sshll.u32 [#allocation2], 4
      %s19 = int_to_ptr.vmem [resolvable:$true] %s18
      %21 = dma.hbm_to_vmem [thread:$0]  %s17, 16, %s19, [#allocation3]
    $region5: #{tpu_custom_call.1} parent=1 // pred_fallthru
      _
    // Predicated region
    $region6: #{tpu_custom_call.1} parent=1 // pred_check
      _
    $region7: #{tpu_custom_call.1} parent=1 // pred_check_branch
      %23 = sbr.rel (0) target = $region9
    $region8: #{tpu_custom_call.1} parent=1 // pred_region
      %25 = vsyncadd [#allocation6], 0
      %s26 = sshll.u32 %s1, 4
      %s27 = int_to_ptr.hbm [resolvable:$true] %s26
      %s28 = sshll.u32 [#allocation5], 4
      %s29 = int_to_ptr.vmem [resolvable:$true] %s28
      %34 = dma.hbm_to_vmem [thread:$0]  %s27, 6144, %s29, [#allocation6], 768, 768, 48
    $region9: #{tpu_custom_call.1} parent=1 // pred_fallthru
      _
    // Predicated region
    $region10: #{tpu_custom_call.1} parent=1 // pred_check
      _
    $region11: #{tpu_custom_call.1} parent=1 // pred_check_branch
      %36 = sbr.rel (0) target = $region13
    $region12: #{tpu_custom_call.1} parent=1 // pred_region
      %38 = vsyncadd [#allocation6], 0
      %s40 = sshll.u32 %s2, 4
      %s41 = int_to_ptr.hbm [resolvable:$true] %s40
      %s42 = sshll.u32 [#allocation7], 4
      %s43 = int_to_ptr.vmem [resolvable:$true] %s42
      %45 = dma.hbm_to_vmem [thread:$0]  %s41, 192, %s43, [#allocation6]
    $region13: #{tpu_custom_call.1} parent=1 // pred_fallthru
      _
    // Predicated region
    $region14: #{tpu_custom_call.1} parent=1 // pred_check
      _
    $region15: #{tpu_custom_call.1} parent=1 // pred_check_branch
      %47 = sbr.rel (0) target = $region17
    $region16: #{tpu_custom_call.1} parent=1 // pred_region
      %49 = dma.done [#allocation3], 16
    $region17: #{tpu_custom_call.1} parent=1 // pred_fallthru
      _
    // Predicated region
    $region18: #{tpu_custom_call.1} parent=1 // pred_check
      _
    $region19: #{tpu_custom_call.1} parent=1 // pred_check_branch
      %51 = sbr.rel (0) target = $region21
    $region20: #{tpu_custom_call.1} parent=1 // pred_region
      %53 = dma.done [#allocation6], 6144
    $region21: #{tpu_custom_call.1} parent=1 // pred_fallthru
      _
    // Predicated region
    $region22: #{tpu_custom_call.1} parent=1 // pred_check
      _
    $region23: #{tpu_custom_call.1} parent=1 // pred_check_branch
      %55 = sbr.rel (0) target = $region25
    $region24: #{tpu_custom_call.1} parent=1 // pred_region
      %57 = dma.done [#allocation6], 192
    $region25: #{tpu_custom_call.1} parent=1 // pred_fallthru
      _
    %v59 = vld [vmem:[#allocation2] sm:$0x1]
    %v60 = vpack.c.bf16 %v59, %v59
    %v61 = vld [vmem:[#allocation5] sm:$0xff]
    %v62 = vld [vmem:[#allocation5 + $0x8] sm:$0xff]
    %v63 = vld [vmem:[#allocation5 + $0x10] sm:$0xff]
    %v64 = vld [vmem:[#allocation5 + $0x18] sm:$0xff]
    %v65 = vld [vmem:[#allocation5 + $0x20] sm:$0xff]
    %v66 = vld [vmem:[#allocation5 + $0x28] sm:$0xff]
    %v67 = vld [vmem:[#allocation5 + $0x30] sm:$0xff]
    %v68 = vld [vmem:[#allocation5 + $0x38] sm:$0xff]
    %v69 = vld [vmem:[#allocation5 + $0x40] sm:$0xff]
    %v70 = vld [vmem:[#allocation5 + $0x48] sm:$0xff]
    %v71 = vld [vmem:[#allocation5 + $0x50] sm:$0xff]
    %v72 = vld [vmem:[#allocation5 + $0x58] sm:$0xff]
    %v73 = vld [vmem:[#allocation5 + $0x60] sm:$0xff]
    %v74 = vld [vmem:[#allocation5 + $0x68] sm:$0xff]
    %v75 = vld [vmem:[#allocation5 + $0x70] sm:$0xff]
    %v76 = vld [vmem:[#allocation5 + $0x78] sm:$0xff]
    %v77 = vld [vmem:[#allocation5 + $0x80] sm:$0xff]
    %v78 = vld [vmem:[#allocation5 + $0x88] sm:$0xff]
    %v79 = vld [vmem:[#allocation5 + $0x90] sm:$0xff]
    %v80 = vld [vmem:[#allocation5 + $0x98] sm:$0xff]
    %v81 = vld [vmem:[#allocation5 + $0xa0] sm:$0xff]
    %v82 = vld [vmem:[#allocation5 + $0xa8] sm:$0xff]
    %v83 = vld [vmem:[#allocation5 + $0xb0] sm:$0xff]
    %v84 = vld [vmem:[#allocation5 + $0xb8] sm:$0xff]
    %v85 = vld [vmem:[#allocation5 + $0xc0] sm:$0xff]
    %v86 = vld [vmem:[#allocation5 + $0xc8] sm:$0xff]
    %v87 = vld [vmem:[#allocation5 + $0xd0] sm:$0xff]
    %v88 = vld [vmem:[#allocation5 + $0xd8] sm:$0xff]
    %v89 = vld [vmem:[#allocation5 + $0xe0] sm:$0xff]
    %v90 = vld [vmem:[#allocation5 + $0xe8] sm:$0xff]
    %v91 = vld [vmem:[#allocation5 + $0xf0] sm:$0xff]
    %v92 = vld [vmem:[#allocation5 + $0xf8] sm:$0xff]
    %v93 = vld [vmem:[#allocation5 + $0x100] sm:$0xff]
    %v94 = vld [vmem:[#allocation5 + $0x108] sm:$0xff]
    %v95 = vld [vmem:[#allocation5 + $0x110] sm:$0xff]
    %v96 = vld [vmem:[#allocation5 + $0x118] sm:$0xff]
    %v97 = vld [vmem:[#allocation5 + $0x120] sm:$0xff]
    %v98 = vld [vmem:[#allocation5 + $0x128] sm:$0xff]
    %v99 = vld [vmem:[#allocation5 + $0x130] sm:$0xff]
    %v100 = vld [vmem:[#allocation5 + $0x138] sm:$0xff]
    %v101 = vld [vmem:[#allocation5 + $0x140] sm:$0xff]
    %v102 = vld [vmem:[#allocation5 + $0x148] sm:$0xff]
    %v103 = vld [vmem:[#allocation5 + $0x150] sm:$0xff]
    %v104 = vld [vmem:[#allocation5 + $0x158] sm:$0xff]
    %v105 = vld [vmem:[#allocation5 + $0x160] sm:$0xff]
    %v106 = vld [vmem:[#allocation5 + $0x168] sm:$0xff]
    %v107 = vld [vmem:[#allocation5 + $0x170] sm:$0xff]
    %v108 = vld [vmem:[#allocation5 + $0x178] sm:$0xff]
    %v109 = vld [vmem:[#allocation7] sm:$0xff]
    %v110 = vld [vmem:[#allocation7 + $0x8] sm:$0xf]
    %v159 = vunpack.c.l.b16 %v61
    %v160 = vunpack.c.h.b16 %v61
    %v161 = vunpack.c.l.b16 %v62
    %v162 = vunpack.c.h.b16 %v62
    %v163 = vunpack.c.l.b16 %v63
    %v164 = vunpack.c.h.b16 %v63
    %v165 = vunpack.c.l.b16 %v64
    %v166 = vunpack.c.h.b16 %v64
    %v167 = vunpack.c.l.b16 %v65
    %v168 = vunpack.c.h.b16 %v65
    %v169 = vunpack.c.l.b16 %v66
    %v170 = vunpack.c.h.b16 %v66
    %v171 = vunpack.c.l.b16 %v67
    %v172 = vunpack.c.h.b16 %v67
    %v173 = vunpack.c.l.b16 %v68
    %v174 = vunpack.c.h.b16 %v68
    %v175 = vunpack.c.l.b16 %v69
    %v176 = vunpack.c.h.b16 %v69
    %v177 = vunpack.c.l.b16 %v70
    %v178 = vunpack.c.h.b16 %v70
    %v179 = vunpack.c.l.b16 %v71
    %v180 = vunpack.c.h.b16 %v71
    %v181 = vunpack.c.l.b16 %v72
    %v182 = vunpack.c.h.b16 %v72
    %v183 = vunpack.c.l.b16 %v73
    %v184 = vunpack.c.h.b16 %v73
    %v185 = vunpack.c.l.b16 %v74
    %v186 = vunpack.c.h.b16 %v74
    %v187 = vunpack.c.l.b16 %v75
    %v188 = vunpack.c.h.b16 %v75
    %v189 = vunpack.c.l.b16 %v76
    %v190 = vunpack.c.h.b16 %v76
    %v191 = vunpack.c.l.b16 %v77
    %v192 = vunpack.c.h.b16 %v77
    %v193 = vunpack.c.l.b16 %v78
    %v194 = vunpack.c.h.b16 %v78
    %v195 = vunpack.c.l.b16 %v79
    %v196 = vunpack.c.h.b16 %v79
    %v197 = vunpack.c.l.b16 %v80
    %v198 = vunpack.c.h.b16 %v80
    %v199 = vunpack.c.l.b16 %v81
    %v200 = vunpack.c.h.b16 %v81
    %v201 = vunpack.c.l.b16 %v82
    %v202 = vunpack.c.h.b16 %v82
    %v203 = vunpack.c.l.b16 %v83
    %v204 = vunpack.c.h.b16 %v83
    %v205 = vunpack.c.l.b16 %v84
    %v206 = vunpack.c.h.b16 %v84
    %v207 = vunpack.c.l.b16 %v85
    %v208 = vunpack.c.h.b16 %v85
    %v209 = vunpack.c.l.b16 %v86
    %v210 = vunpack.c.h.b16 %v86
    %v211 = vunpack.c.l.b16 %v87
    %v212 = vunpack.c.h.b16 %v87
    %v213 = vunpack.c.l.b16 %v88
    %v214 = vunpack.c.h.b16 %v88
    %v215 = vunpack.c.l.b16 %v89
    %v216 = vunpack.c.h.b16 %v89
    %v217 = vunpack.c.l.b16 %v90
    %v218 = vunpack.c.h.b16 %v90
    %v219 = vunpack.c.l.b16 %v91
    %v220 = vunpack.c.h.b16 %v91
    %v221 = vunpack.c.l.b16 %v92
    %v222 = vunpack.c.h.b16 %v92
    %v223 = vunpack.c.l.b16 %v93
    %v224 = vunpack.c.h.b16 %v93
    %v225 = vunpack.c.l.b16 %v94
    %v226 = vunpack.c.h.b16 %v94
    %v227 = vunpack.c.l.b16 %v95
    %v228 = vunpack.c.h.b16 %v95
    %v229 = vunpack.c.l.b16 %v96
    %v230 = vunpack.c.h.b16 %v96
    %v231 = vunpack.c.l.b16 %v97
    %v232 = vunpack.c.h.b16 %v97
    %v233 = vunpack.c.l.b16 %v98
    %v234 = vunpack.c.h.b16 %v98
    %v235 = vunpack.c.l.b16 %v99
    %v236 = vunpack.c.h.b16 %v99
    %v237 = vunpack.c.l.b16 %v100
    %v238 = vunpack.c.h.b16 %v100
    %v239 = vunpack.c.l.b16 %v101
    %v240 = vunpack.c.h.b16 %v101
    %v241 = vunpack.c.l.b16 %v102
    %v242 = vunpack.c.h.b16 %v102
    %v243 = vunpack.c.l.b16 %v103
    %v244 = vunpack.c.h.b16 %v103
    %v245 = vunpack.c.l.b16 %v104
    %v246 = vunpack.c.h.b16 %v104
    %v247 = vunpack.c.l.b16 %v105
    %v248 = vunpack.c.h.b16 %v105
    %v249 = vunpack.c.l.b16 %v106
    %v250 = vunpack.c.h.b16 %v106
    %v251 = vunpack.c.l.b16 %v107
    %v252 = vunpack.c.h.b16 %v107
    %v253 = vunpack.c.l.b16 %v108
    %v254 = vunpack.c.h.b16 %v108
    %v255 = vpack.c.b16 %v171, %v159
    %v256 = vpack.c.b16 %v172, %v160
    %v257 = vpack.c.b16 %v173, %v161
    %v258 = vpack.c.b16 %v174, %v162
    %v259 = vpack.c.b16 %v175, %v163
    %v260 = vpack.c.b16 %v176, %v164
    %v261 = vpack.c.b16 %v177, %v165
    %v262 = vpack.c.b16 %v178, %v166
    %v263 = vpack.c.b16 %v179, %v167
    %v264 = vpack.c.b16 %v180, %v168
    %v265 = vpack.c.b16 %v181, %v169
    %v266 = vpack.c.b16 %v182, %v170
    %v267 = vpack.c.b16 %v195, %v183
    %v268 = vpack.c.b16 %v196, %v184
    %v269 = vpack.c.b16 %v197, %v185
    %v270 = vpack.c.b16 %v198, %v186
    %v271 = vpack.c.b16 %v199, %v187
    %v272 = vpack.c.b16 %v200, %v188
    %v273 = vpack.c.b16 %v201, %v189
    %v274 = vpack.c.b16 %v202, %v190
    %v275 = vpack.c.b16 %v203, %v191
    %v276 = vpack.c.b16 %v204, %v192
    %v277 = vpack.c.b16 %v205, %v193
    %v278 = vpack.c.b16 %v206, %v194
    %v279 = vpack.c.b16 %v219, %v207
    %v280 = vpack.c.b16 %v220, %v208
    %v281 = vpack.c.b16 %v221, %v209
    %v282 = vpack.c.b16 %v222, %v210
    %v283 = vpack.c.b16 %v223, %v211
    %v284 = vpack.c.b16 %v224, %v212
    %v285 = vpack.c.b16 %v225, %v213
    %v286 = vpack.c.b16 %v226, %v214
    %v287 = vpack.c.b16 %v227, %v215
    %v288 = vpack.c.b16 %v228, %v216
    %v289 = vpack.c.b16 %v229, %v217
    %v290 = vpack.c.b16 %v230, %v218
    %v291 = vpack.c.b16 %v243, %v231
    %v292 = vpack.c.b16 %v244, %v232
    %v293 = vpack.c.b16 %v245, %v233
    %v294 = vpack.c.b16 %v246, %v234
    %v295 = vpack.c.b16 %v247, %v235
    %v296 = vpack.c.b16 %v248, %v236
    %v297 = vpack.c.b16 %v249, %v237
    %v298 = vpack.c.b16 %v250, %v238
    %v299 = vpack.c.b16 %v251, %v239
    %v300 = vpack.c.b16 %v252, %v240
    %v301 = vpack.c.b16 %v253, %v241
    %v302 = vpack.c.b16 %v254, %v242
    %v353 = vperm.slane %v109, 0
    %v354 = vperm.slane %v109, 1
    %v355 = vperm.slane %v109, 2
    %v356 = vperm.slane %v109, 3
    %v357 = vperm.slane %v109, 4
    %v358 = vperm.slane %v109, 5
    %v359 = vperm.slane %v109, 6
    %v360 = vperm.slane %v109, 7
    %v361 = vperm.slane %v110, 0
    %v362 = vperm.slane %v110, 1
    %v363 = vperm.slane %v110, 2
    %v364 = vperm.slane %v110, 3
    %vm377 = vcmask 523264
    %v379 = vsel %vm377, %v60, 0
    %381 = vmatpush.bf16.msra.mxu0 0
    %382 = vmatpush.bf16.msra.mxu0 0
    %383 = vmatpush.bf16.msra.mxu0 0
    %384 = vmatpush.bf16.msra.mxu0 0
    %385 = vmatpush.bf16.msra.mxu0 %v291
    %386 = vmatpush.bf16.msra.mxu0 %v279
    %387 = vmatpush.bf16.msra.mxu0 %v267
    %388 = vmatpush.bf16.msra.mxu0 %v255
    %389 = vmatmul.bf16.gmra.mxu0 %v379
    %v390 = vpop.f32.mrf.mxu0
    %v391 = vadd.f32 %v353, %v390
    %v392 = vpop.f32.mrf.mxu0
    %393 = vdwg.mxu0
    %394 = vmatpush.bf16.msra.mxu0 0
    %395 = vmatpush.bf16.msra.mxu0 0
    %396 = vmatpush.bf16.msra.mxu0 0
    %397 = vmatpush.bf16.msra.mxu0 0
    %398 = vmatpush.bf16.msra.mxu0 %v292
    %399 = vmatpush.bf16.msra.mxu0 %v280
    %400 = vmatpush.bf16.msra.mxu0 %v268
    %401 = vmatpush.bf16.msra.mxu0 %v256
    %402 = vmatmul.bf16.gmra.mxu0 %v379
    %v403 = vpop.f32.mrf.mxu0
    %v404 = vadd.f32 %v354, %v403
    %v405 = vpop.f32.mrf.mxu0
    %406 = vdwg.mxu0
    %407 = vmatpush.bf16.msra.mxu0 0
    %408 = vmatpush.bf16.msra.mxu0 0
    %409 = vmatpush.bf16.msra.mxu0 0
    %410 = vmatpush.bf16.msra.mxu0 0
    %411 = vmatpush.bf16.msra.mxu0 %v293
    %412 = vmatpush.bf16.msra.mxu0 %v281
    %413 = vmatpush.bf16.msra.mxu0 %v269
    %414 = vmatpush.bf16.msra.mxu0 %v257
    %415 = vmatmul.bf16.gmra.mxu0 %v379
    %v416 = vpop.f32.mrf.mxu0
    %v417 = vadd.f32 %v355, %v416
    %v418 = vpop.f32.mrf.mxu0
    %419 = vdwg.mxu0
    %420 = vmatpush.bf16.msra.mxu0 0
    %421 = vmatpush.bf16.msra.mxu0 0
    %422 = vmatpush.bf16.msra.mxu0 0
    %423 = vmatpush.bf16.msra.mxu0 0
    %424 = vmatpush.bf16.msra.mxu0 %v294
    %425 = vmatpush.bf16.msra.mxu0 %v282
    %426 = vmatpush.bf16.msra.mxu0 %v270
    %427 = vmatpush.bf16.msra.mxu0 %v258
    %428 = vmatmul.bf16.gmra.mxu0 %v379
    %v429 = vpop.f32.mrf.mxu0
    %v430 = vadd.f32 %v356, %v429
    %v431 = vpop.f32.mrf.mxu0
    %432 = vdwg.mxu0
    %433 = vmatpush.bf16.msra.mxu0 0
    %434 = vmatpush.bf16.msra.mxu0 0
    %435 = vmatpush.bf16.msra.mxu0 0
    %436 = vmatpush.bf16.msra.mxu0 0
    %437 = vmatpush.bf16.msra.mxu0 %v295
    %438 = vmatpush.bf16.msra.mxu0 %v283
    %439 = vmatpush.bf16.msra.mxu0 %v271
    %440 = vmatpush.bf16.msra.mxu0 %v259
    %441 = vmatmul.bf16.gmra.mxu0 %v379
    %v442 = vpop.f32.mrf.mxu0
    %v443 = vadd.f32 %v357, %v442
    %v444 = vpop.f32.mrf.mxu0
    %445 = vdwg.mxu0
    %446 = vmatpush.bf16.msra.mxu0 0
    %447 = vmatpush.bf16.msra.mxu0 0
    %448 = vmatpush.bf16.msra.mxu0 0
    %449 = vmatpush.bf16.msra.mxu0 0
    %450 = vmatpush.bf16.msra.mxu0 %v296
    %451 = vmatpush.bf16.msra.mxu0 %v284
    %452 = vmatpush.bf16.msra.mxu0 %v272
    %453 = vmatpush.bf16.msra.mxu0 %v260
    %454 = vmatmul.bf16.gmra.mxu0 %v379
    %v455 = vpop.f32.mrf.mxu0
    %v456 = vadd.f32 %v358, %v455
    %v457 = vpop.f32.mrf.mxu0
    %458 = vdwg.mxu0
    %459 = vmatpush.bf16.msra.mxu0 0
    %460 = vmatpush.bf16.msra.mxu0 0
    %461 = vmatpush.bf16.msra.mxu0 0
    %462 = vmatpush.bf16.msra.mxu0 0
    %463 = vmatpush.bf16.msra.mxu0 %v297
    %464 = vmatpush.bf16.msra.mxu0 %v285
    %465 = vmatpush.bf16.msra.mxu0 %v273
    %466 = vmatpush.bf16.msra.mxu0 %v261
    %467 = vmatmul.bf16.gmra.mxu0 %v379
    %v468 = vpop.f32.mrf.mxu0
    %v469 = vadd.f32 %v359, %v468
    %v470 = vpop.f32.mrf.mxu0
    %471 = vdwg.mxu0
    %472 = vmatpush.bf16.msra.mxu0 0
    %473 = vmatpush.bf16.msra.mxu0 0
    %474 = vmatpush.bf16.msra.mxu0 0
    %475 = vmatpush.bf16.msra.mxu0 0
    %476 = vmatpush.bf16.msra.mxu0 %v298
    %477 = vmatpush.bf16.msra.mxu0 %v286
    %478 = vmatpush.bf16.msra.mxu0 %v274
    %479 = vmatpush.bf16.msra.mxu0 %v262
    %480 = vmatmul.bf16.gmra.mxu0 %v379
    %v481 = vpop.f32.mrf.mxu0
    %v482 = vadd.f32 %v360, %v481
    %v483 = vpop.f32.mrf.mxu0
    %484 = vdwg.mxu0
    %485 = vmatpush.bf16.msra.mxu0 0
    %486 = vmatpush.bf16.msra.mxu0 0
    %487 = vmatpush.bf16.msra.mxu0 0
    %488 = vmatpush.bf16.msra.mxu0 0
    %489 = vmatpush.bf16.msra.mxu0 %v299
    %490 = vmatpush.bf16.msra.mxu0 %v287
    %491 = vmatpush.bf16.msra.mxu0 %v275
    %492 = vmatpush.bf16.msra.mxu0 %v263
    %493 = vmatmul.bf16.gmra.mxu0 %v379
    %v494 = vpop.f32.mrf.mxu0
    %v495 = vadd.f32 %v361, %v494
    %v496 = vpop.f32.mrf.mxu0
    %497 = vdwg.mxu0
    %498 = vmatpush.bf16.msra.mxu0 0
    %499 = vmatpush.bf16.msra.mxu0 0
    %500 = vmatpush.bf16.msra.mxu0 0
    %501 = vmatpush.bf16.msra.mxu0 0
    %502 = vmatpush.bf16.msra.mxu0 %v300
    %503 = vmatpush.bf16.msra.mxu0 %v288
    %504 = vmatpush.bf16.msra.mxu0 %v276
    %505 = vmatpush.bf16.msra.mxu0 %v264
    %506 = vmatmul.bf16.gmra.mxu0 %v379
    %v507 = vpop.f32.mrf.mxu0
    %v508 = vadd.f32 %v362, %v507
    %v509 = vpop.f32.mrf.mxu0
    %510 = vdwg.mxu0
    %511 = vmatpush.bf16.msra.mxu0 0
    %512 = vmatpush.bf16.msra.mxu0 0
    %513 = vmatpush.bf16.msra.mxu0 0
    %514 = vmatpush.bf16.msra.mxu0 0
    %515 = vmatpush.bf16.msra.mxu0 %v301
    %516 = vmatpush.bf16.msra.mxu0 %v289
    %517 = vmatpush.bf16.msra.mxu0 %v277
    %518 = vmatpush.bf16.msra.mxu0 %v265
    %519 = vmatmul.bf16.gmra.mxu0 %v379
    %v520 = vpop.f32.mrf.mxu0
    %v521 = vadd.f32 %v363, %v520
    %v522 = vpop.f32.mrf.mxu0
    %523 = vdwg.mxu0
    %524 = vmatpush.bf16.msra.mxu0 0
    %525 = vmatpush.bf16.msra.mxu0 0
    %526 = vmatpush.bf16.msra.mxu0 0
    %527 = vmatpush.bf16.msra.mxu0 0
    %528 = vmatpush.bf16.msra.mxu0 %v302
    %529 = vmatpush.bf16.msra.mxu0 %v290
    %530 = vmatpush.bf16.msra.mxu0 %v278
    %531 = vmatpush.bf16.msra.mxu0 %v266
    %532 = vmatmul.bf16.gmra.mxu0 %v379
    %v533 = vpop.f32.mrf.mxu0
    %v534 = vadd.f32 %v364, %v533
    %v535 = vpop.f32.mrf.mxu0
    %536 = vdwg.mxu0
    %v549 = vrot.slane %v404, 7
    %v550 = vrot.slane %v417, 6
    %v551 = vrot.slane %v430, 5
    %v552 = vrot.slane %v443, 4
    %v553 = vrot.slane %v456, 3
    %v554 = vrot.slane %v469, 2
    %v555 = vrot.slane %v482, 1
    %v556 = vrot.slane %v508, 7
    %v557 = vrot.slane %v521, 6
    %v558 = vrot.slane %v534, 5
    %vm559 = vcmask 1040384
    %v560 = vsel %vm559, %v391, %v549
    %vm561 = vcmask 1042434
    %v562 = vsel %vm561, %v550, %v551
    %vm563 = vcmask 1041408
    %v564 = vsel %vm563, %v560, %v562
    %vm565 = vcmask 1044484
    %v566 = vsel %vm565, %v552, %v553
    %vm567 = vcmask 1046534
    %v568 = vsel %vm567, %v554, %v555
    %vm569 = vcmask 1045508
    %v570 = vsel %vm569, %v566, %v568
    %vm571 = vcmask 1043456
    %v572 = vsel %vm571, %v564, %v570
    %v573 = vsel %vm559, %v495, %v556
    %v574 = vsel %vm561, %v557, %v558
    %v575 = vsel %vm563, %v573, %v574
    %578 = vst [vmem:[#allocation8] sm:$0xff] %v572
    %v579 = vlaneseq
    %vm580 = vcmp.ge.s32.totalorder %v579, 0
    %vm581 = vcmp.lt.s32.totalorder %v579, 512
    %vm582 = vmand %vm580, %vm581
    %583 = vst.msk [vmem:[#allocation8 + $0x8] sm:$0xf] %vm582, %v575
    // Predicated region
    $region26: #{tpu_custom_call.1} parent=1 // pred_check
      _
    $region27: #{tpu_custom_call.1} parent=1 // pred_check_branch
      %585 = sbr.rel (0) target = $region29
    $region28: #{tpu_custom_call.1} parent=1 // pred_region
      %587 = vsyncadd [#allocation4], 0
      %s589 = sshll.u32 [#allocation8], 4
      %s590 = int_to_ptr.vmem [resolvable:$true] %s589
      %s591 = sshll.u32 %s3, 4
      %s592 = int_to_ptr.hbm [resolvable:$true] %s591
      %594 = dma.vmem_to_hbm [thread:$0]  %s590, 192, %s592, [#allocation4]
    $region29: #{tpu_custom_call.1} parent=1 // pred_fallthru
      _
    // Predicated region
    $region30: #{tpu_custom_call.1} parent=1 // pred_check
      _
    $region31: #{tpu_custom_call.1} parent=1 // pred_check_branch
      %596 = sbr.rel (0) target = $region33
    $region32: #{tpu_custom_call.1} parent=1 // pred_region
      %598 = dma.done [#allocation4], 192
    $region33: #{tpu_custom_call.1} parent=1 // pred_fallthru
      _
    %599 = vsyncpa [#allocation3], 1
    %600 = vsyncpa [#allocation6], 1
    %601 = vsyncpa [#allocation4], 1

</llo_original>
